<compile_context>
chip_gen: v7x
topology: tpu7x:2x2x1
jax: 0.10.0
libtpu: 0.0.40
codegen_flags: <defaults>
</compile_context>

<pallas_src>
import jax
import jax.numpy as jnp
from jax.experimental import pallas as pl
from jax.experimental.pallas import tpu as pltpu


HIDDEN = 128


def _round_up(x, m):
    return ((x + m - 1) // m) * m


def actor_kernel(obs_ref, w1_ref, b1_ref, w2_ref, b2_ref, w3_ref, b3_ref, out_ref):
    # FC1 + ReLU  (bf16 MXU operands, f32 accumulation, f32 epilogue on the VPU)
    x = obs_ref[...].astype(jnp.bfloat16)
    h1 = jnp.dot(x, w1_ref[...], preferred_element_type=jnp.float32)
    h1 = jnp.maximum(h1 + b1_ref[...], 0.0)
    # FC2 + ReLU
    h2 = jnp.dot(h1.astype(jnp.bfloat16), w2_ref[...], preferred_element_type=jnp.float32)
    h2 = jnp.maximum(h2 + b2_ref[...], 0.0)
    # FC3 (no activation, matches Actor.forward). w3 is zero-padded to 128 output lanes
    # for the MXU; slice back to the real dim_action before the (small) store.
    h3 = jnp.dot(h2.astype(jnp.bfloat16), w3_ref[...], preferred_element_type=jnp.float32)
    da = out_ref.shape[-1]
    out_ref[...] = (h3[:, :da] + b3_ref[...]).astype(out_ref.dtype)


def prepare_actor_params(params):
    """One-time prep: pad FC3 weights to 128 output lanes for the MXU and cast matmul
    operands to bf16. Call once; re-use the result across every forward call."""
    dim_action = params["w3"].shape[1]
    out_pad = _round_up(dim_action, 128)
    w3p = jnp.zeros((HIDDEN, out_pad), params["w3"].dtype).at[:, :dim_action].set(params["w3"])
    return {
        "w1": params["w1"].astype(jnp.bfloat16),
        "b1": params["b1"].astype(jnp.float32),
        "w2": params["w2"].astype(jnp.bfloat16),
        "b2": params["b2"].astype(jnp.float32),
        "w3p": w3p.astype(jnp.bfloat16),
        "b3": params["b3"].astype(jnp.float32),   # kept unpadded: output is unpadded
    }


def _actor_forward_xla(obs, prep):
    """Plain-XLA path for tiny batches where pallas_call fixed cost dominates."""
    dim_action = prep["b3"].shape[1]
    h1 = jnp.maximum(
        jnp.dot(obs.astype(jnp.bfloat16), prep["w1"], preferred_element_type=jnp.float32)
        + prep["b1"], 0.0)
    h2 = jnp.maximum(
        jnp.dot(h1.astype(jnp.bfloat16), prep["w2"], preferred_element_type=jnp.float32)
        + prep["b2"], 0.0)
    h3 = jnp.dot(h2.astype(jnp.bfloat16), prep["w3p"], preferred_element_type=jnp.float32)
    return h3[:, :dim_action] + prep["b3"]


def actor_forward(obs, prep, *, tile_b=1024, core_parallel=False, xla_fallback_batch=None):
    """obs: [B, dim_obs] (f32 or bf16).  prep: output of prepare_actor_params.
    Returns [B, dim_action] f32."""
    B, dim_obs = obs.shape
    dim_action = prep["b3"].shape[1]
    out_pad = prep["w3p"].shape[1]

    if xla_fallback_batch is not None and B < xla_fallback_batch:
        return _actor_forward_xla(obs, prep)

    # ---- batch tiling (pad rows so the grid divides evenly; tile multiple of 8) ----
    if B >= tile_b:
        tb = tile_b
        pad_B = _round_up(B, tb)
    else:
        pad_B = _round_up(B, 8)
        tb = pad_B
    obs_p = obs if pad_B == B else jnp.pad(obs, ((0, pad_B - B), (0, 0)))
    n_tiles = pad_B // tb

    # Weights/biases: whole array, VMEM-resident for the entire grid (no per-step DMA).
    vmem_full = pl.BlockSpec(memory_space=pltpu.MemorySpace.VMEM)

    obs_bytes = obs_p.size * obs_p.dtype.itemsize
    weight_bytes = (prep["w1"].size + prep["w2"].size + prep["w3p"].size) * 2 \
                 + (prep["b1"].size + prep["b2"].size + prep["b3"].size) * 4
    cost = pl.CostEstimate(
        flops=2 * pad_B * (dim_obs * HIDDEN + HIDDEN * HIDDEN + HIDDEN * out_pad),
        transcendentals=0,
        bytes_accessed=obs_bytes + pad_B * dim_action * 4 + weight_bytes,
    )

    # v7x: pass core_parallel=True to shard the batch axis across both TensorCores.
    # Kept off by default so the kernel compiles/runs unchanged on single-TC chips.
    sem = pltpu.CORE_PARALLEL if core_parallel else pltpu.PARALLEL

    out = pl.pallas_call(
        actor_kernel,
        out_shape=jax.ShapeDtypeStruct((pad_B, dim_action), jnp.float32),
        grid=(n_tiles,),
        in_specs=[
            pl.BlockSpec((tb, dim_obs), lambda i: (i, 0)),  # obs tile, pipelined
            vmem_full,  # w1 (bf16)
            vmem_full,  # b1 (f32)
            vmem_full,  # w2 (bf16)
            vmem_full,  # b2 (f32)
            vmem_full,  # w3 padded to 128 lanes (bf16)
            vmem_full,  # b3 (f32, unpadded)
        ],
        # Unpadded output: last block dim equals the full array dim -> legal BlockSpec,
        # and ~16x less HBM writeback than the previous 128-wide padded f32 output.
        out_specs=pl.BlockSpec((tb, dim_action), lambda i: (i, 0)),
        compiler_params=pltpu.CompilerParams(dimension_semantics=(sem,)),
        cost_estimate=cost,
    )(obs_p, prep["w1"], prep["b1"], prep["w2"], prep["b2"], prep["w3p"], prep["b3"])

    return out if pad_B == B else out[:B]


def init_actor_params(key, dim_observation, dim_action, hidden=HIDDEN):
    """Deterministic init mimicking PyTorch Linear default (uniform +/- 1/sqrt(fan_in))."""
    def linear(key, fan_in, fan_out):
        kw, kb = jax.random.split(key)
        bound = 1.0 / jnp.sqrt(jnp.asarray(fan_in, jnp.float32))
        w = jax.random.uniform(kw, (fan_in, fan_out), jnp.float32, -bound, bound)
        b = jax.random.uniform(kb, (1, fan_out), jnp.float32, -bound, bound)
        return w, b

    k1, k2, k3 = jax.random.split(key, 3)
    w1, b1 = linear(k1, dim_observation, hidden)
    w2, b2 = linear(k2, hidden, hidden)
    w3, b3 = linear(k3, hidden, dim_action)
    return {"w1": w1, "b1": b1, "w2": w2, "b2": b2, "w3": w3, "b3": b3}


def actor_forward_ref(obs, p):
    """Reference with the same bf16-operand / f32-accumulate arithmetic as the kernel."""
    bf = jnp.bfloat16
    h1 = jnp.maximum(
        jnp.dot(obs.astype(bf), p["w1"].astype(bf), preferred_element_type=jnp.float32) + p["b1"], 0.0)
    h2 = jnp.maximum(
        jnp.dot(h1.astype(bf), p["w2"].astype(bf), preferred_element_type=jnp.float32) + p["b2"], 0.0)
    return jnp.dot(h2.astype(bf), p["w3"].astype(bf), preferred_element_type=jnp.float32) + p["b3"]


if __name__ == "__main__":
    B = 8
    dim_observation = 32
    dim_action = 8

    key = jax.random.PRNGKey(0)
    k_obs, k_params = jax.random.split(key)
    obs = jax.random.normal(k_obs, (B, dim_observation), jnp.float32)
    params = init_actor_params(k_params, dim_observation, dim_action)
    prep = prepare_actor_params(params)   # one-time: bf16 casts + FC3 lane padding

    # Small-batch single-tile pallas path.
    out = jax.block_until_ready(actor_forward(obs, prep))
    ref = actor_forward_ref(obs, params)
    assert out.shape == (B, dim_action)
    assert jnp.allclose(out, ref, atol=2e-3, rtol=2e-3), "mismatch vs reference (small batch)"

    # Multi-tile grid + row-padding path (B not a multiple of the tile).
    obs_big = jax.random.normal(jax.random.PRNGKey(1), (300, dim_observation), jnp.float32)
    out_big = jax.block_until_ready(actor_forward(obs_big, prep, tile_b=128))
    ref_big = actor_forward_ref(obs_big, params)
    assert out_big.shape == (300, dim_action)
    assert jnp.allclose(out_big, ref_big, atol=2e-3, rtol=2e-3), "mismatch vs reference (tiled batch)"

    # Tiny-batch XLA fallback path (pallas launch overhead dominates at B=8).
    out_xla = jax.block_until_ready(actor_forward(obs, prep, xla_fallback_batch=256))
    assert jnp.allclose(out_xla, ref, atol=2e-3, rtol=2e-3), "mismatch vs reference (XLA fallback)"

    print("KERNEL_OK")
</pallas_src>

<mosaic_0001>
module attributes {stable_mosaic.version = 11 : i64} {
  func.func @actor_kernel(%arg0: i32, %arg1: memref<8x32xf32, #tpu.memory_space<vmem>>, %arg2: memref<32x128xbf16, #tpu.memory_space<vmem>>, %arg3: memref<1x128xf32, #tpu.memory_space<vmem>>, %arg4: memref<128x128xbf16, #tpu.memory_space<vmem>>, %arg5: memref<1x128xf32, #tpu.memory_space<vmem>>, %arg6: memref<128x128xbf16, #tpu.memory_space<vmem>>, %arg7: memref<1x8xf32, #tpu.memory_space<vmem>>, %arg8: memref<8x8xf32, #tpu.memory_space<vmem>>) attributes {dimension_semantics = [#tpu.dimension_semantics<parallel>], iteration_bounds = array<i64: 1>, scalar_prefetch = 0 : i64, scratch_operands = 0 : i64, tpu.core_type = #tpu.core_type<tc>, window_params = [{transform_indices = @transform_0, window_bounds = array<i64: 8, 32>}, {pipeline_mode = #tpu.pipeline_mode<synchronous>, transform_indices = @transform_1, window_bounds = array<i64: 32, 128>}, {pipeline_mode = #tpu.pipeline_mode<synchronous>, transform_indices = @transform_2, window_bounds = array<i64: 1, 128>}, {pipeline_mode = #tpu.pipeline_mode<synchronous>, transform_indices = @transform_3, window_bounds = array<i64: 128, 128>}, {pipeline_mode = #tpu.pipeline_mode<synchronous>, transform_indices = @transform_4, window_bounds = array<i64: 1, 128>}, {pipeline_mode = #tpu.pipeline_mode<synchronous>, transform_indices = @transform_5, window_bounds = array<i64: 128, 128>}, {pipeline_mode = #tpu.pipeline_mode<synchronous>, transform_indices = @transform_6, window_bounds = array<i64: 1, 8>}, {transform_indices = @transform_7, window_bounds = array<i64: 8, 8>}]} {
    %c0 = arith.constant 0 : index
    %c0_0 = arith.constant 0 : index
    %0 = vector.load %arg1[%c0, %c0_0] : memref<8x32xf32, #tpu.memory_space<vmem>>, vector<8x32xf32>
    %1 = arith.truncf %0 : vector<8x32xf32> to vector<8x32xbf16>
    %c0_1 = arith.constant 0 : index
    %c0_2 = arith.constant 0 : index
    %2 = vector.load %arg2[%c0_1, %c0_2] : memref<32x128xbf16, #tpu.memory_space<vmem>>, vector<32x128xbf16>
    %cst = arith.constant dense<0.000000e+00> : vector<8x128xf32>
    %3 = tpu.matmul %1, %2, %cst {dimension_numbers = #tpu.dot_dimension_numbers<[1], [0], [0], [1], [0, 0, 1, 1], [], []>} : vector<8x32xbf16>, vector<32x128xbf16>, vector<8x128xf32> -> vector<8x128xf32>
    %c0_3 = arith.constant 0 : index
    %c0_4 = arith.constant 0 : index
    %4 = vector.load %arg3[%c0_3, %c0_4] : memref<1x128xf32, #tpu.memory_space<vmem>>, vector<1x128xf32>
    %5 = vector.broadcast %4 : vector<1x128xf32> to vector<8x128xf32>
    %6 = arith.addf %3, %5 : vector<8x128xf32>
    %cst_5 = arith.constant 0.000000e+00 : f32
    %7 = vector.broadcast %cst_5 : f32 to vector<8x128xf32>
    %8 = arith.maximumf %6, %7 : vector<8x128xf32>
    %9 = arith.truncf %8 : vector<8x128xf32> to vector<8x128xbf16>
    %c0_6 = arith.constant 0 : index
    %c0_7 = arith.constant 0 : index
    %10 = vector.load %arg4[%c0_6, %c0_7] : memref<128x128xbf16, #tpu.memory_space<vmem>>, vector<128x128xbf16>
    %cst_8 = arith.constant dense<0.000000e+00> : vector<8x128xf32>
    %11 = tpu.matmul %9, %10, %cst_8 {dimension_numbers = #tpu.dot_dimension_numbers<[1], [0], [0], [1], [0, 0, 1, 1], [], []>} : vector<8x128xbf16>, vector<128x128xbf16>, vector<8x128xf32> -> vector<8x128xf32>
    %c0_9 = arith.constant 0 : index
    %c0_10 = arith.constant 0 : index
    %12 = vector.load %arg5[%c0_9, %c0_10] : memref<1x128xf32, #tpu.memory_space<vmem>>, vector<1x128xf32>
    %13 = vector.broadcast %12 : vector<1x128xf32> to vector<8x128xf32>
    %14 = arith.addf %11, %13 : vector<8x128xf32>
    %cst_11 = arith.constant 0.000000e+00 : f32
    %15 = vector.broadcast %cst_11 : f32 to vector<8x128xf32>
    %16 = arith.maximumf %14, %15 : vector<8x128xf32>
    %17 = arith.truncf %16 : vector<8x128xf32> to vector<8x128xbf16>
    %c0_12 = arith.constant 0 : index
    %c0_13 = arith.constant 0 : index
    %18 = vector.load %arg6[%c0_12, %c0_13] : memref<128x128xbf16, #tpu.memory_space<vmem>>, vector<128x128xbf16>
    %cst_14 = arith.constant dense<0.000000e+00> : vector<8x128xf32>
    %19 = tpu.matmul %17, %18, %cst_14 {dimension_numbers = #tpu.dot_dimension_numbers<[1], [0], [0], [1], [0, 0, 1, 1], [], []>} : vector<8x128xbf16>, vector<128x128xbf16>, vector<8x128xf32> -> vector<8x128xf32>
    %20 = vector.extract_strided_slice %19 {offsets = [0, 0], sizes = [8, 8], strides = [1, 1]} : vector<8x128xf32> to vector<8x8xf32>
    %c0_15 = arith.constant 0 : index
    %c0_16 = arith.constant 0 : index
    %21 = vector.load %arg7[%c0_15, %c0_16] : memref<1x8xf32, #tpu.memory_space<vmem>>, vector<1x8xf32>
    %22 = vector.broadcast %21 : vector<1x8xf32> to vector<8x8xf32>
    %23 = arith.addf %20, %22 : vector<8x8xf32>
    %c0_17 = arith.constant 0 : index
    %c0_18 = arith.constant 0 : index
    %24 = vector.load %arg8[%c0_17, %c0_18] : memref<8x8xf32, #tpu.memory_space<vmem>>, vector<8x8xf32>
    tpu.vector_store %arg8[%c0_17, %c0_18], %23 {strides = array<i32>} : memref<8x8xf32, #tpu.memory_space<vmem>>, vector<8x8xf32>,
    return
  }
  func.func @transform_0(%arg0: i32) -> (i32, i32) {
    %c0_i32 = arith.constant 0 : i32
    %c0_i32_0 = arith.constant 0 : i32
    return %arg0, %c0_i32 : i32, i32
  }
  func.func @transform_1(%arg0: i32) -> (i32, i32) {
    %c0_i32 = arith.constant 0 : i32
    %c0_i32_0 = arith.constant 0 : i32
    %c0_i32_1 = arith.constant 0 : i32
    return %c0_i32, %c0_i32_0 : i32, i32
  }
  func.func @transform_2(%arg0: i32) -> (i32, i32) {
    %c0_i32 = arith.constant 0 : i32
    %c0_i32_0 = arith.constant 0 : i32
    %c0_i32_1 = arith.constant 0 : i32
    return %c0_i32, %c0_i32_0 : i32, i32
  }
  func.func @transform_3(%arg0: i32) -> (i32, i32) {
    %c0_i32 = arith.constant 0 : i32
    %c0_i32_0 = arith.constant 0 : i32
    %c0_i32_1 = arith.constant 0 : i32
    return %c0_i32, %c0_i32_0 : i32, i32
  }
  func.func @transform_4(%arg0: i32) -> (i32, i32) {
    %c0_i32 = arith.constant 0 : i32
    %c0_i32_0 = arith.constant 0 : i32
    %c0_i32_1 = arith.constant 0 : i32
    return %c0_i32, %c0_i32_0 : i32, i32
  }
  func.func @transform_5(%arg0: i32) -> (i32, i32) {
    %c0_i32 = arith.constant 0 : i32
    %c0_i32_0 = arith.constant 0 : i32
    %c0_i32_1 = arith.constant 0 : i32
    return %c0_i32, %c0_i32_0 : i32, i32
  }
  func.func @transform_6(%arg0: i32) -> (i32, i32) {
    %c0_i32 = arith.constant 0 : i32
    %c0_i32_0 = arith.constant 0 : i32
    %c0_i32_1 = arith.constant 0 : i32
    return %c0_i32, %c0_i32_0 : i32, i32
  }
  func.func @transform_7(%arg0: i32) -> (i32, i32) {
    %c0_i32 = arith.constant 0 : i32
    %c0_i32_0 = arith.constant 0 : i32
    return %arg0, %c0_i32 : i32, i32
  }
}

</mosaic_0001>

<llo_original>
// kernel: tpu_custom_call.1
$region0: #{tpu_custom_call.1}
  #allocation0 [shape = 'u32[]', space=smem, size = 0x4, offset = 0x4, fixed_abs, tag = 'smem constant byte address 0x4 - core index']
  #allocation1 [shape = 'u32[144,128]{1,0:T(1,128)}', space=vmem, size = 0x12000, scoped, tag = 'internal scratch']
  %s0 = inlined_call_operand.hbm [shape: f32[8,32], index: 0, kind: input, shape index: {}]
  %s1 = inlined_call_operand.hbm [shape: bf16[32,128], index: 1, kind: input, shape index: {}]
  %s2 = inlined_call_operand.vmem [shape: f32[1,128], index: 2, kind: input, shape index: {}]
  %s3 = inlined_call_operand.hbm [shape: bf16[128,128], index: 3, kind: input, shape index: {}]
  %s4 = inlined_call_operand.vmem [shape: f32[1,128], index: 4, kind: input, shape index: {}]
  %s5 = inlined_call_operand.hbm [shape: bf16[128,128], index: 5, kind: input, shape index: {}]
  %s6 = inlined_call_operand.vmem [shape: f32[1,8], index: 6, kind: input, shape index: {}]
  %s7 = inlined_call_operand.hbm [shape: f32[8,8], index: 7, kind: output, shape index: {}]
  %s8 = sld [smem:[#allocation0]]
  $region54: #{tpu_custom_call.1} parent=0
    _
  %s10 = ssub.s32 1, %s8
  %s11 = scalar_select 0, %s10, %s8
  $region1: #{tpu_custom_call.1} parent=0
    #allocation2 [shape = 'u8[4096]{0}', space=vmem, size = 0x1000, scoped, tag = 'input window, operand 0, single buffered']
    #allocation3 [shape = 's32[1]{0}', space=sflag, size = 0x4, scoped, tag = 'scoped memory for tpu_custom_call.1']
    #allocation4 [shape = 's32[1]{0}', space=sflag, size = 0x4, scoped, tag = 'scoped memory for tpu_custom_call.1']
    #allocation5 [shape = 'u8[8192]{0}', space=vmem, size = 0x2000, scoped, tag = 'input window, operand 1, single buffered']
    #allocation6 [shape = 's32[1]{0}', space=sflag, size = 0x4, scoped, tag = 'scoped memory for tpu_custom_call.1']
    #allocation7 [shape = 'u8[32768]{0}', space=vmem, size = 0x8000, scoped, tag = 'input window, operand 3, single buffered']
    #allocation8 [shape = 'u8[32768]{0}', space=vmem, size = 0x8000, scoped, tag = 'input window, operand 5, single buffered']
    #allocation9 [shape = 's32[1]{0}', space=sflag, size = 0x4, scoped, tag = 'scoped memory for tpu_custom_call.1']
    #allocation10 [shape = 'u8[4096]{0}', space=vmem, size = 0x1000, scoped, tag = 'output window, operand 0, single buffered']
    %12 = vsyncpa [#allocation3], 0
    %13 = vsyncpa [#allocation6], 0
    %14 = vsyncpa [#allocation9], 0
    %15 = vsyncpa [#allocation4], 0
    // Predicated region
    $region2: #{tpu_custom_call.1} parent=1 // pred_check
      _
    $region3: #{tpu_custom_call.1} parent=1 // pred_check_branch
      %17 = sbr.rel (0) target = $region5
    $region4: #{tpu_custom_call.1} parent=1 // pred_region
      %s19 = ssub.s32 128, 128
      %20 = vsyncadd [#allocation3], %s19
      %s22 = sshll.u32 [#allocation2], 4
      %s23 = int_to_ptr.vmem [resolvable:$true] %s22
      %25 = dma.hbm_to_vmem [thread:$0]  %s0, 128, %s23, [#allocation3]
    $region5: #{tpu_custom_call.1} parent=1 // pred_fallthru
      _
    // Predicated region
    $region6: #{tpu_custom_call.1} parent=1 // pred_check
      _
    $region7: #{tpu_custom_call.1} parent=1 // pred_check_branch
      %27 = sbr.rel (0) target = $region9
    $region8: #{tpu_custom_call.1} parent=1 // pred_region
      %s29 = ssub.s32 256, 256
      %30 = vsyncadd [#allocation6], %s29
      %s31 = sshll.u32 [#allocation5], 4
      %s32 = int_to_ptr.vmem [resolvable:$true] %s31
      %37 = dma.hbm_to_vmem [thread:$0]  %s1, 256, %s32, [#allocation6], 64, 64, 4
    $region9: #{tpu_custom_call.1} parent=1 // pred_fallthru
      _
    // Predicated region
    $region10: #{tpu_custom_call.1} parent=1 // pred_check
      _
    $region11: #{tpu_custom_call.1} parent=1 // pred_check_branch
      %39 = sbr.rel (0) target = $region13
    $region12: #{tpu_custom_call.1} parent=1 // pred_region
      _
    $region13: #{tpu_custom_call.1} parent=1 // pred_fallthru
      _
    // Predicated region
    $region14: #{tpu_custom_call.1} parent=1 // pred_check
      _
    $region15: #{tpu_custom_call.1} parent=1 // pred_check_branch
      %41 = sbr.rel (0) target = $region17
    $region16: #{tpu_custom_call.1} parent=1 // pred_region
      %s43 = ssub.s32 1024, 1024
      %44 = vsyncadd [#allocation6], %s43
      %s45 = sshll.u32 [#allocation7], 4
      %s46 = int_to_ptr.vmem [resolvable:$true] %s45
      %51 = dma.hbm_to_vmem [thread:$0]  %s3, 1024, %s46, [#allocation6], 64, 64, 4
    $region17: #{tpu_custom_call.1} parent=1 // pred_fallthru
      _
    // Predicated region
    $region18: #{tpu_custom_call.1} parent=1 // pred_check
      _
    $region19: #{tpu_custom_call.1} parent=1 // pred_check_branch
      %53 = sbr.rel (0) target = $region21
    $region20: #{tpu_custom_call.1} parent=1 // pred_region
      _
    $region21: #{tpu_custom_call.1} parent=1 // pred_fallthru
      _
    // Predicated region
    $region22: #{tpu_custom_call.1} parent=1 // pred_check
      _
    $region23: #{tpu_custom_call.1} parent=1 // pred_check_branch
      %55 = sbr.rel (0) target = $region25
    $region24: #{tpu_custom_call.1} parent=1 // pred_region
      %s57 = ssub.s32 1024, 1024
      %58 = vsyncadd [#allocation9], %s57
      %s59 = sshll.u32 [#allocation8], 4
      %s60 = int_to_ptr.vmem [resolvable:$true] %s59
      %65 = dma.hbm_to_vmem [thread:$0]  %s5, 1024, %s60, [#allocation9], 64, 64, 4
    $region25: #{tpu_custom_call.1} parent=1 // pred_fallthru
      _
    // Predicated region
    $region26: #{tpu_custom_call.1} parent=1 // pred_check
      _
    $region27: #{tpu_custom_call.1} parent=1 // pred_check_branch
      %67 = sbr.rel (0) target = $region29
    $region28: #{tpu_custom_call.1} parent=1 // pred_region
      _
    $region29: #{tpu_custom_call.1} parent=1 // pred_fallthru
      _
    // Predicated region
    $region30: #{tpu_custom_call.1} parent=1 // pred_check
      _
    $region31: #{tpu_custom_call.1} parent=1 // pred_check_branch
      %69 = sbr.rel (0) target = $region33
    $region32: #{tpu_custom_call.1} parent=1 // pred_region
      %70 = dma.done [#allocation3], 128
    $region33: #{tpu_custom_call.1} parent=1 // pred_fallthru
      _
    // Predicated region
    $region34: #{tpu_custom_call.1} parent=1 // pred_check
      _
    $region35: #{tpu_custom_call.1} parent=1 // pred_check_branch
      %72 = sbr.rel (0) target = $region37
    $region36: #{tpu_custom_call.1} parent=1 // pred_region
      %73 = dma.done [#allocation6], 256
    $region37: #{tpu_custom_call.1} parent=1 // pred_fallthru
      _
    // Predicated region
    $region38: #{tpu_custom_call.1} parent=1 // pred_check
      _
    $region39: #{tpu_custom_call.1} parent=1 // pred_check_branch
      %75 = sbr.rel (0) target = $region41
    $region40: #{tpu_custom_call.1} parent=1 // pred_region
      %76 = dma.done [#allocation6], 1024
    $region41: #{tpu_custom_call.1} parent=1 // pred_fallthru
      _
    // Predicated region
    $region42: #{tpu_custom_call.1} parent=1 // pred_check
      _
    $region43: #{tpu_custom_call.1} parent=1 // pred_check_branch
      %78 = sbr.rel (0) target = $region45
    $region44: #{tpu_custom_call.1} parent=1 // pred_region
      %79 = dma.done [#allocation9], 1024
    $region45: #{tpu_custom_call.1} parent=1 // pred_fallthru
      _
    %v81 = vld [vmem:[#allocation2] sm:$0xff]
    %v82 = vpack.c.bf16 %v81, %v81
    %v83 = vld [vmem:[#allocation5] sm:$0xf]
    %v84 = vld [vmem:[#allocation5 + $0x4] sm:$0xf]
    %v85 = vld [vmem:[#allocation5 + $0x8] sm:$0xf]
    %v86 = vld [vmem:[#allocation5 + $0xc] sm:$0xf]
    %v87 = vld [vmem:[%s2] sm:$0x1]
    %v89 = vlaneseq
    %v90 = vshrl.u32 %v89, 7
    %v91 = vsub.s32 0, %v90
    %v92 = vrot.slane %v87, %v91
    %v98 = vunpack.c.l.b16 %v83
    %v99 = vunpack.c.l.b16 %v84
    %v100 = vunpack.c.l.b16 %v85
    %v101 = vunpack.c.l.b16 %v86
    %v102 = vpack.c.b16 %v99, %v98
    %v103 = vpack.c.b16 %v101, %v100
    %vm106 = vcmask 261120
    %v108 = vsel %vm106, %v82, 0
    %110 = vmatprep.subr.bf16.mxu0 0
    %111 = vmatpush1.bf16.msra.mxu0 %v102
    %112 = vmatprep.subr.bf16.mxu0 0
    %113 = vmatpush1.bf16.msra.mxu0 %v103
    %114 = vmatprep.subr.bf16.mxu0 0
    %115 = vmatpush1.bf16.msra.mxu0 0
    %116 = vmatprep.subr.bf16.mxu0 0
    %117 = vmatpush1.bf16.msra.mxu0 0
    %118 = vmatprep.subr.bf16.mxu0 0
    %119 = vmatpush1.bf16.msra.mxu0 0
    %120 = vmatprep.subr.bf16.mxu0 0
    %121 = vmatpush1.bf16.msra.mxu0 0
    %122 = vmatprep.subr.bf16.mxu0 0
    %123 = vmatpush1.bf16.msra.mxu0 0
    %124 = vmatprep.subr.bf16.mxu0 0
    %125 = vmatpush1.bf16.msra.mxu0 0
    %126 = vmatprep.subr.bf16.mxu0 0
    %127 = vmatpush1.bf16.msra.mxu0 0
    %128 = vmatprep.subr.bf16.mxu0 0
    %129 = vmatpush1.bf16.msra.mxu0 0
    %130 = vmatprep.subr.bf16.mxu0 0
    %131 = vmatpush1.bf16.msra.mxu0 0
    %132 = vmatprep.subr.bf16.mxu0 0
    %133 = vmatpush1.bf16.msra.mxu0 0
    %134 = vmatprep.subr.bf16.mxu0 0
    %135 = vmatpush1.bf16.msra.mxu0 0
    %136 = vmatprep.subr.bf16.mxu0 0
    %137 = vmatpush1.bf16.msra.mxu0 0
    %138 = vmatprep.subr.bf16.mxu0 0
    %139 = vmatpush1.bf16.msra.mxu0 0
    %140 = vmatprep.subr.bf16.mxu0 0
    %141 = vmatpush1.bf16.msra.mxu0 0
    %142 = vmatprep.mubr.bf16.mxu0 0
    %143 = vmatmul.mubr.bf16.gmra.mrb[0].mxu0 %v108
    %v144 = vpop.f32.mrb[0].mxu0
    %v145 = vadd.f32 %v92, %v144
    %v146 = vpop.f32.mrb[0].mxu0
    %v147 = vpop.f32.mrb[0].mxu0
    %v148 = vpop.f32.mrb[0].mxu0
    %149 = vdwg.mxu0
    %v150 = vmax.f32 %v145, 0.0
    %v151 = vpack.c.bf16 %v150, %v150
    %v152 = vld [vmem:[#allocation7] sm:$0xf]
    %v153 = vld [vmem:[#allocation7 + $0x4] sm:$0xf]
    %v154 = vld [vmem:[#allocation7 + $0x8] sm:$0xf]
    %v155 = vld [vmem:[#allocation7 + $0xc] sm:$0xf]
    %v156 = vld [vmem:[#allocation7 + $0x10] sm:$0xf]
    %v157 = vld [vmem:[#allocation7 + $0x14] sm:$0xf]
    %v158 = vld [vmem:[#allocation7 + $0x18] sm:$0xf]
    %v159 = vld [vmem:[#allocation7 + $0x1c] sm:$0xf]
    %v160 = vld [vmem:[#allocation7 + $0x20] sm:$0xf]
    %v161 = vld [vmem:[#allocation7 + $0x24] sm:$0xf]
    %v162 = vld [vmem:[#allocation7 + $0x28] sm:$0xf]
    %v163 = vld [vmem:[#allocation7 + $0x2c] sm:$0xf]
    %v164 = vld [vmem:[#allocation7 + $0x30] sm:$0xf]
    %v165 = vld [vmem:[#allocation7 + $0x34] sm:$0xf]
    %v166 = vld [vmem:[#allocation7 + $0x38] sm:$0xf]
    %v167 = vld [vmem:[#allocation7 + $0x3c] sm:$0xf]
    %v168 = vld [vmem:[%s4] sm:$0x1]
    %v170 = vlaneseq
    %v171 = vshrl.u32 %v170, 7
    %v172 = vsub.s32 0, %v171
    %v173 = vrot.slane %v168, %v172
    %v191 = vunpack.c.l.b16 %v152
    %v192 = vunpack.c.l.b16 %v153
    %v193 = vunpack.c.l.b16 %v154
    %v194 = vunpack.c.l.b16 %v155
    %v195 = vunpack.c.l.b16 %v156
    %v196 = vunpack.c.l.b16 %v157
    %v197 = vunpack.c.l.b16 %v158
    %v198 = vunpack.c.l.b16 %v159
    %v199 = vunpack.c.l.b16 %v160
    %v200 = vunpack.c.l.b16 %v161
    %v201 = vunpack.c.l.b16 %v162
    %v202 = vunpack.c.l.b16 %v163
    %v203 = vunpack.c.l.b16 %v164
    %v204 = vunpack.c.l.b16 %v165
    %v205 = vunpack.c.l.b16 %v166
    %v206 = vunpack.c.l.b16 %v167
    %v207 = vpack.c.b16 %v192, %v191
    %v208 = vpack.c.b16 %v194, %v193
    %v209 = vpack.c.b16 %v196, %v195
    %v210 = vpack.c.b16 %v198, %v197
    %v211 = vpack.c.b16 %v200, %v199
    %v212 = vpack.c.b16 %v202, %v201
    %v213 = vpack.c.b16 %v204, %v203
    %v214 = vpack.c.b16 %v206, %v205
    %223 = vmatprep.subr.bf16.mxu0 0
    %224 = vmatpush1.bf16.msra.mxu0 %v207
    %225 = vmatprep.subr.bf16.mxu0 0
    %226 = vmatpush1.bf16.msra.mxu0 %v208
    %227 = vmatprep.subr.bf16.mxu0 0
    %228 = vmatpush1.bf16.msra.mxu0 %v209
    %229 = vmatprep.subr.bf16.mxu0 0
    %230 = vmatpush1.bf16.msra.mxu0 %v210
    %231 = vmatprep.subr.bf16.mxu0 0
    %232 = vmatpush1.bf16.msra.mxu0 %v211
    %233 = vmatprep.subr.bf16.mxu0 0
    %234 = vmatpush1.bf16.msra.mxu0 %v212
    %235 = vmatprep.subr.bf16.mxu0 0
    %236 = vmatpush1.bf16.msra.mxu0 %v213
    %237 = vmatprep.subr.bf16.mxu0 0
    %238 = vmatpush1.bf16.msra.mxu0 %v214
    %239 = vmatprep.subr.bf16.mxu0 0
    %240 = vmatpush1.bf16.msra.mxu0 0
    %241 = vmatprep.subr.bf16.mxu0 0
    %242 = vmatpush1.bf16.msra.mxu0 0
    %243 = vmatprep.subr.bf16.mxu0 0
    %244 = vmatpush1.bf16.msra.mxu0 0
    %245 = vmatprep.subr.bf16.mxu0 0
    %246 = vmatpush1.bf16.msra.mxu0 0
    %247 = vmatprep.subr.bf16.mxu0 0
    %248 = vmatpush1.bf16.msra.mxu0 0
    %249 = vmatprep.subr.bf16.mxu0 0
    %250 = vmatpush1.bf16.msra.mxu0 0
    %251 = vmatprep.subr.bf16.mxu0 0
    %252 = vmatpush1.bf16.msra.mxu0 0
    %253 = vmatprep.subr.bf16.mxu0 0
    %254 = vmatpush1.bf16.msra.mxu0 0
    %255 = vmatprep.mubr.bf16.mxu0 0
    %256 = vmatmul.mubr.bf16.gmra.mrb[0].mxu0 %v151
    %v257 = vpop.f32.mrb[0].mxu0
    %v258 = vadd.f32 %v173, %v257
    %v259 = vpop.f32.mrb[0].mxu0
    %v260 = vpop.f32.mrb[0].mxu0
    %v261 = vpop.f32.mrb[0].mxu0
    %262 = vdwg.mxu0
    %v263 = vmax.f32 %v258, 0.0
    %v264 = vpack.c.bf16 %v263, %v263
    %v265 = vld [vmem:[#allocation8] sm:$0xf]
    %v266 = vld [vmem:[#allocation8 + $0x4] sm:$0xf]
    %v267 = vld [vmem:[#allocation8 + $0x8] sm:$0xf]
    %v268 = vld [vmem:[#allocation8 + $0xc] sm:$0xf]
    %v269 = vld [vmem:[#allocation8 + $0x10] sm:$0xf]
    %v270 = vld [vmem:[#allocation8 + $0x14] sm:$0xf]
    %v271 = vld [vmem:[#allocation8 + $0x18] sm:$0xf]
    %v272 = vld [vmem:[#allocation8 + $0x1c] sm:$0xf]
    %v273 = vld [vmem:[#allocation8 + $0x20] sm:$0xf]
    %v274 = vld [vmem:[#allocation8 + $0x24] sm:$0xf]
    %v275 = vld [vmem:[#allocation8 + $0x28] sm:$0xf]
    %v276 = vld [vmem:[#allocation8 + $0x2c] sm:$0xf]
    %v277 = vld [vmem:[#allocation8 + $0x30] sm:$0xf]
    %v278 = vld [vmem:[#allocation8 + $0x34] sm:$0xf]
    %v279 = vld [vmem:[#allocation8 + $0x38] sm:$0xf]
    %v280 = vld [vmem:[#allocation8 + $0x3c] sm:$0xf]
    %v297 = vunpack.c.l.b16 %v265
    %v298 = vunpack.c.l.b16 %v266
    %v299 = vunpack.c.l.b16 %v267
    %v300 = vunpack.c.l.b16 %v268
    %v301 = vunpack.c.l.b16 %v269
    %v302 = vunpack.c.l.b16 %v270
    %v303 = vunpack.c.l.b16 %v271
    %v304 = vunpack.c.l.b16 %v272
    %v305 = vunpack.c.l.b16 %v273
    %v306 = vunpack.c.l.b16 %v274
    %v307 = vunpack.c.l.b16 %v275
    %v308 = vunpack.c.l.b16 %v276
    %v309 = vunpack.c.l.b16 %v277
    %v310 = vunpack.c.l.b16 %v278
    %v311 = vunpack.c.l.b16 %v279
    %v312 = vunpack.c.l.b16 %v280
    %v313 = vpack.c.b16 %v298, %v297
    %v314 = vpack.c.b16 %v300, %v299
    %v315 = vpack.c.b16 %v302, %v301
    %v316 = vpack.c.b16 %v304, %v303
    %v317 = vpack.c.b16 %v306, %v305
    %v318 = vpack.c.b16 %v308, %v307
    %v319 = vpack.c.b16 %v310, %v309
    %v320 = vpack.c.b16 %v312, %v311
    %329 = vmatprep.subr.bf16.mxu0 0
    %330 = vmatpush1.bf16.msra.mxu0 %v313
    %331 = vmatprep.subr.bf16.mxu0 0
    %332 = vmatpush1.bf16.msra.mxu0 %v314
    %333 = vmatprep.subr.bf16.mxu0 0
    %334 = vmatpush1.bf16.msra.mxu0 %v315
    %335 = vmatprep.subr.bf16.mxu0 0
    %336 = vmatpush1.bf16.msra.mxu0 %v316
    %337 = vmatprep.subr.bf16.mxu0 0
    %338 = vmatpush1.bf16.msra.mxu0 %v317
    %339 = vmatprep.subr.bf16.mxu0 0
    %340 = vmatpush1.bf16.msra.mxu0 %v318
    %341 = vmatprep.subr.bf16.mxu0 0
    %342 = vmatpush1.bf16.msra.mxu0 %v319
    %343 = vmatprep.subr.bf16.mxu0 0
    %344 = vmatpush1.bf16.msra.mxu0 %v320
    %345 = vmatprep.subr.bf16.mxu0 0
    %346 = vmatpush1.bf16.msra.mxu0 0
    %347 = vmatprep.subr.bf16.mxu0 0
    %348 = vmatpush1.bf16.msra.mxu0 0
    %349 = vmatprep.subr.bf16.mxu0 0
    %350 = vmatpush1.bf16.msra.mxu0 0
    %351 = vmatprep.subr.bf16.mxu0 0
    %352 = vmatpush1.bf16.msra.mxu0 0
    %353 = vmatprep.subr.bf16.mxu0 0
    %354 = vmatpush1.bf16.msra.mxu0 0
    %355 = vmatprep.subr.bf16.mxu0 0
    %356 = vmatpush1.bf16.msra.mxu0 0
    %357 = vmatprep.subr.bf16.mxu0 0
    %358 = vmatpush1.bf16.msra.mxu0 0
    %359 = vmatprep.subr.bf16.mxu0 0
    %360 = vmatpush1.bf16.msra.mxu0 0
    %361 = vmatprep.mubr.bf16.mxu0 0
    %362 = vmatmul.mubr.bf16.gmra.mrb[0].mxu0 %v264
    %v363 = vpop.f32.mrb[0].mxu0
    %v364 = vadd.f32 0.0, %v363
    %v365 = vpop.f32.mrb[0].mxu0
    %v366 = vpop.f32.mrb[0].mxu0
    %v367 = vpop.f32.mrb[0].mxu0
    %368 = vdwg.mxu0
    %v369 = vld [vmem:[%s6] sm:$0x1]
    %v371 = vlaneseq
    %v372 = vshrl.u32 %v371, 7
    %v373 = vsub.s32 0, %v372
    %v374 = vrot.slane %v369, %v373
    %v376 = vadd.f32 %v364, %v374
    %vm377 = vcmask 64512
    %378 = vst.msk [vmem:[#allocation10] sm:$0xff] %vm377, %v376
    // Predicated region
    $region46: #{tpu_custom_call.1} parent=1 // pred_check
      _
    $region47: #{tpu_custom_call.1} parent=1 // pred_check_branch
      %380 = sbr.rel (0) target = $region49
    $region48: #{tpu_custom_call.1} parent=1 // pred_region
      %s382 = ssub.s32 128, 128
      %383 = vsyncadd [#allocation4], %s382
      %s385 = sshll.u32 [#allocation10], 4
      %s386 = int_to_ptr.vmem [resolvable:$true] %s385
      %388 = dma.vmem_to_hbm [thread:$0]  %s386, 128, %s7, [#allocation4]
    $region49: #{tpu_custom_call.1} parent=1 // pred_fallthru
      _
    // Predicated region
    $region50: #{tpu_custom_call.1} parent=1 // pred_check
      _
    $region51: #{tpu_custom_call.1} parent=1 // pred_check_branch
      %390 = sbr.rel (0) target = $region53
    $region52: #{tpu_custom_call.1} parent=1 // pred_region
      %391 = dma.done [#allocation4], 128
    $region53: #{tpu_custom_call.1} parent=1 // pred_fallthru
      _
    %392 = vsyncpa [#allocation3], 1
    %393 = vsyncpa [#allocation6], 1
    %394 = vsyncpa [#allocation9], 1
    %395 = vsyncpa [#allocation4], 1

</llo_original>
